<compile_context>
chip_gen: v7x
topology: tpu7x:2x2x1
jax: 0.10.0
libtpu: 0.0.40
codegen_flags: <defaults>
</compile_context>

<pallas_src>
import functools

import jax
import jax.numpy as jnp
import numpy as np
from jax.experimental import pallas as pl
from jax.experimental.pallas import tpu as pltpu


def _encode_kernel(x_ref, s_ref, fh_ref, fw_ref, m_ref, y_ref, *, H, CW):
    # x_ref : (1, 2H, CW)   rows [0:H) = real(x) tiled over coils, [H:2H) = imag
    # s_ref : (2H, CW)      rows [0:H) = real(S) coil-major,      [H:2H) = imag
    # fh_ref: (2H, 2H)      [[Fhr, -Fhi], [Fhi, Fhr]]
    # fw_ref: (CW, 2CW)     [ blockdiag_C(FwT_r) | blockdiag_C(FwT_i) ]
    # m_ref : (H, 2CW)      sampling mask tiled over coils and real/imag halves
    # y_ref : (1, H, 2CW)   [ real | imag ] packed, coil-major within each half
    x = x_ref[0]                       # (2H, CW)
    s = s_ref[...]                     # (2H, CW)
    xr, xi = x[:H], x[H:]
    sr, si = s[:H], s[H:]

    # z = S * x  (complex elementwise product), stacked [zr; zi] along sublanes
    zr = sr * xr - si * xi
    zi = sr * xi + si * xr
    z = jnp.concatenate([zr, zi], axis=0)                      # (2H, CW)

    # t = F_H @ z  (complex) via one real block matmul: K = 2H, lanes = C*W
    t = jnp.dot(fh_ref[...], z, preferred_element_type=jnp.float32)   # (2H, CW)

    # u = t @ F_W^T (complex, per coil) via one real matmul against the
    # [R_big | I_big] block-diagonal slab: K = C*W, lanes = 2*C*W (= 128)
    u = jnp.dot(t, fw_ref[...], preferred_element_type=jnp.float32)   # (2H, 2CW)

    ur = u[:H, :CW] - u[H:, CW:]       # Tr@R - Ti@I
    ui = u[:H, CW:] + u[H:, :CW]       # Tr@I + Ti@R

    # Lane-dense (16, 128) masked k-space output, single unmasked store.
    y_ref[0] = m_ref[...] * jnp.concatenate([ur, ui], axis=1)


@jax.jit
def encode_forward(xr, xi, sr, si, fhr, fhi, fwr, fwi, mask):
    N, H, W = xr.shape
    C = sr.shape[0]
    CW = C * W

    # --- pack operands (done once in XLA; the kernel sees lane-dense slabs) ---
    # x tiled over coils along lanes, real stacked over imag along sublanes.
    xr_w = jnp.tile(xr, (1, 1, C))                              # (N, H, CW)
    xi_w = jnp.tile(xi, (1, 1, C))
    x_pk = jnp.concatenate([xr_w, xi_w], axis=1)                # (N, 2H, CW)

    # coil maps laid out coil-major along lanes: [h, c*W + w] = S[c, h, w]
    sr_w = jnp.transpose(sr, (1, 0, 2)).reshape(H, CW)
    si_w = jnp.transpose(si, (1, 0, 2)).reshape(H, CW)
    s_pk = jnp.concatenate([sr_w, si_w], axis=0)                # (2H, CW)

    # left DFT as real block matrix (2H, 2H)
    fh_blk = jnp.concatenate(
        [jnp.concatenate([fhr, -fhi], axis=1),
         jnp.concatenate([fhi, fhr], axis=1)], axis=0)

    # right DFT: per-coil block-diagonal of F_W^T, real and imag halves side
    # by side -> (CW, 2CW); makes the right matmul a single 128-lane push.
    eye_c = jnp.eye(C, dtype=jnp.float32)
    r_big = jnp.kron(eye_c, fwr.T)
    i_big = jnp.kron(eye_c, fwi.T)
    fw_big = jnp.concatenate([r_big, i_big], axis=1)            # (CW, 2CW)

    # mask tiled to match the packed (H, 2CW) output slab
    m2 = jnp.tile(mask, (1, 2 * C))                             # (H, 2CW)

    kernel = functools.partial(_encode_kernel, H=H, CW=CW)

    y_pk = pl.pallas_call(
        kernel,
        out_shape=jax.ShapeDtypeStruct((N, H, 2 * CW), jnp.float32),
        grid_spec=pltpu.PrefetchScalarGridSpec(
            num_scalar_prefetch=0,
            grid=(N,),
            in_specs=[
                pl.BlockSpec((1, 2 * H, CW), lambda n: (n, 0, 0)),   # x_pk
                pl.BlockSpec((2 * H, CW), lambda n: (0, 0)),         # s_pk
                pl.BlockSpec((2 * H, 2 * H), lambda n: (0, 0)),      # fh_blk
                pl.BlockSpec((CW, 2 * CW), lambda n: (0, 0)),        # fw_big
                pl.BlockSpec((H, 2 * CW), lambda n: (0, 0)),         # mask
            ],
            out_specs=pl.BlockSpec((1, H, 2 * CW), lambda n: (n, 0, 0)),
        ),
        compiler_params=pltpu.CompilerParams(
            dimension_semantics=("parallel",),
            vmem_limit_bytes=32 * 1024 * 1024,
        ),
    )(x_pk, s_pk, fh_blk, fw_big, m2)

    # unpack lane-dense result back to (N, C, H, W) real / imag
    yr = y_pk[:, :, :CW].reshape(N, H, C, W).transpose(0, 2, 1, 3)
    yi = y_pk[:, :, CW:].reshape(N, H, C, W).transpose(0, 2, 1, 3)
    return yr, yi


def _dft_matrix(n):
    # Real/imag parts of the unnormalized DFT matrix exp(-2*pi*i*j*k/n).
    j = np.arange(n)[:, None]
    k = np.arange(n)[None, :]
    ang = -2.0 * np.pi * j * k / n
    return np.cos(ang).astype(np.float32), np.sin(ang).astype(np.float32)


if __name__ == "__main__":
    # Small deterministic problem: batch=2, coils=4, spatial=16x16.
    N, C, H, W = 2, 4, 16, 16

    key = jax.random.PRNGKey(0)
    k_xr, k_xi, k_sr, k_si = jax.random.split(key, 4)

    xr = jax.random.normal(k_xr, (N, H, W), dtype=jnp.float32)
    xi = jax.random.normal(k_xi, (N, H, W), dtype=jnp.float32)
    sr = jax.random.normal(k_sr, (C, H, W), dtype=jnp.float32)
    si = jax.random.normal(k_si, (C, H, W), dtype=jnp.float32)

    fhr_np, fhi_np = _dft_matrix(H)
    fwr_np, fwi_np = _dft_matrix(W)
    fhr = jnp.asarray(fhr_np)
    fhi = jnp.asarray(fhi_np)
    fwr = jnp.asarray(fwr_np)
    fwi = jnp.asarray(fwi_np)

    # Deterministic Cartesian sampling mask: keep every other k-space line.
    mask_np = np.zeros((H, W), dtype=np.float32)
    mask_np[::2, :] = 1.0
    mask = jnp.asarray(mask_np)

    yr, yi = encode_forward(xr, xi, sr, si, fhr, fhi, fwr, fwi, mask)
    jax.block_until_ready((yr, yi))

    # Pure-JAX reference (complex arithmetic).
    x_c = (xr + 1j * xi).astype(jnp.complex64)
    s_c = (sr + 1j * si).astype(jnp.complex64)
    fh_c = (fhr + 1j * fhi).astype(jnp.complex64)
    fw_c = (fwr + 1j * fwi).astype(jnp.complex64)
    z = s_c[None, :, :, :] * x_c[:, None, :, :]                  # [N,C,H,W]
    t = jnp.einsum("hk,nckw->nchw", fh_c, z)                     # F_H @ z
    u = jnp.einsum("nchk,wk->nchw", t, fw_c)                     # t @ F_W^T
    y_ref = mask[None, None] * u
    np.testing.assert_allclose(np.asarray(yr), np.asarray(y_ref.real),
                               rtol=2e-4, atol=2e-3)
    np.testing.assert_allclose(np.asarray(yi), np.asarray(y_ref.imag),
                               rtol=2e-4, atol=2e-3)

    print("KERNEL_OK")
</pallas_src>

<mosaic_0001>
module attributes {stable_mosaic.version = 11 : i64} {
  func.func @_encode_kernel(%arg0: i32, %arg1: memref<1x32x64xf32, #tpu.memory_space<vmem>>, %arg2: memref<32x64xf32, #tpu.memory_space<vmem>>, %arg3: memref<32x32xf32, #tpu.memory_space<vmem>>, %arg4: memref<64x128xf32, #tpu.memory_space<vmem>>, %arg5: memref<16x128xf32, #tpu.memory_space<vmem>>, %arg6: memref<1x16x128xf32, #tpu.memory_space<vmem>>) attributes {dimension_semantics = [#tpu.dimension_semantics<parallel>], iteration_bounds = array<i64: 2>, scalar_prefetch = 0 : i64, scratch_operands = 0 : i64, tpu.core_type = #tpu.core_type<tc>, window_params = [{transform_indices = @transform_0, window_bounds = array<i64: 1, 32, 64>}, {pipeline_mode = #tpu.pipeline_mode<synchronous>, transform_indices = @transform_1, window_bounds = array<i64: 32, 64>}, {pipeline_mode = #tpu.pipeline_mode<synchronous>, transform_indices = @transform_2, window_bounds = array<i64: 32, 32>}, {pipeline_mode = #tpu.pipeline_mode<synchronous>, transform_indices = @transform_3, window_bounds = array<i64: 64, 128>}, {pipeline_mode = #tpu.pipeline_mode<synchronous>, transform_indices = @transform_4, window_bounds = array<i64: 16, 128>}, {transform_indices = @transform_5, window_bounds = array<i64: 1, 16, 128>}]} {
    %c0 = arith.constant 0 : index
    %c0_0 = arith.constant 0 : index
    %c0_1 = arith.constant 0 : index
    %0 = vector.load %arg1[%c0, %c0_0, %c0_1] : memref<1x32x64xf32, #tpu.memory_space<vmem>>, vector<1x32x64xf32>
    %1 = vector.shape_cast %0 : vector<1x32x64xf32> to vector<32x64xf32>
    %c0_2 = arith.constant 0 : index
    %c0_3 = arith.constant 0 : index
    %2 = vector.load %arg2[%c0_2, %c0_3] : memref<32x64xf32, #tpu.memory_space<vmem>>, vector<32x64xf32>
    %3 = vector.extract_strided_slice %1 {offsets = [0, 0], sizes = [16, 64], strides = [1, 1]} : vector<32x64xf32> to vector<16x64xf32>
    %4 = vector.extract_strided_slice %1 {offsets = [16, 0], sizes = [16, 64], strides = [1, 1]} : vector<32x64xf32> to vector<16x64xf32>
    %5 = vector.extract_strided_slice %2 {offsets = [0, 0], sizes = [16, 64], strides = [1, 1]} : vector<32x64xf32> to vector<16x64xf32>
    %6 = vector.extract_strided_slice %2 {offsets = [16, 0], sizes = [16, 64], strides = [1, 1]} : vector<32x64xf32> to vector<16x64xf32>
    %7 = arith.mulf %5, %3 : vector<16x64xf32>
    %8 = arith.mulf %6, %4 : vector<16x64xf32>
    %9 = arith.subf %7, %8 : vector<16x64xf32>
    %10 = arith.mulf %5, %4 : vector<16x64xf32>
    %11 = arith.mulf %6, %3 : vector<16x64xf32>
    %12 = arith.addf %10, %11 : vector<16x64xf32>
    %13 = tpu.concatenate %9, %12 in 0 : vector<16x64xf32>, vector<16x64xf32> -> vector<32x64xf32>
    %c0_4 = arith.constant 0 : index
    %c0_5 = arith.constant 0 : index
    %14 = vector.load %arg3[%c0_4, %c0_5] : memref<32x32xf32, #tpu.memory_space<vmem>>, vector<32x32xf32>
    %cst = arith.constant dense<0.000000e+00> : vector<32x64xf32>
    %15 = tpu.matmul %14, %13, %cst {dimension_numbers = #tpu.dot_dimension_numbers<[1], [0], [0], [1], [0, 0, 1, 1], [], []>} : vector<32x32xf32>, vector<32x64xf32>, vector<32x64xf32> -> vector<32x64xf32>
    %c0_6 = arith.constant 0 : index
    %c0_7 = arith.constant 0 : index
    %16 = vector.load %arg4[%c0_6, %c0_7] : memref<64x128xf32, #tpu.memory_space<vmem>>, vector<64x128xf32>
    %cst_8 = arith.constant dense<0.000000e+00> : vector<32x128xf32>
    %17 = tpu.matmul %15, %16, %cst_8 {dimension_numbers = #tpu.dot_dimension_numbers<[1], [0], [0], [1], [0, 0, 1, 1], [], []>} : vector<32x64xf32>, vector<64x128xf32>, vector<32x128xf32> -> vector<32x128xf32>
    %18 = vector.extract_strided_slice %17 {offsets = [0, 0], sizes = [16, 64], strides = [1, 1]} : vector<32x128xf32> to vector<16x64xf32>
    %19 = vector.extract_strided_slice %17 {offsets = [16, 64], sizes = [16, 64], strides = [1, 1]} : vector<32x128xf32> to vector<16x64xf32>
    %20 = arith.subf %18, %19 : vector<16x64xf32>
    %21 = vector.extract_strided_slice %17 {offsets = [0, 64], sizes = [16, 64], strides = [1, 1]} : vector<32x128xf32> to vector<16x64xf32>
    %22 = vector.extract_strided_slice %17 {offsets = [16, 0], sizes = [16, 64], strides = [1, 1]} : vector<32x128xf32> to vector<16x64xf32>
    %23 = arith.addf %21, %22 : vector<16x64xf32>
    %c0_9 = arith.constant 0 : index
    %c0_10 = arith.constant 0 : index
    %24 = vector.load %arg5[%c0_9, %c0_10] : memref<16x128xf32, #tpu.memory_space<vmem>>, vector<16x128xf32>
    %25 = tpu.concatenate %20, %23 in 1 : vector<16x64xf32>, vector<16x64xf32> -> vector<16x128xf32>
    %26 = arith.mulf %24, %25 : vector<16x128xf32>
    %c0_11 = arith.constant 0 : index
    %c0_12 = arith.constant 0 : index
    %c0_13 = arith.constant 0 : index
    %27 = vector.load %arg6[%c0_11, %c0_12, %c0_13] : memref<1x16x128xf32, #tpu.memory_space<vmem>>, vector<1x16x128xf32>
    %28 = vector.shape_cast %27 : vector<1x16x128xf32> to vector<16x128xf32>
    %29 = vector.shape_cast %26 : vector<16x128xf32> to vector<1x16x128xf32>
    tpu.vector_store %arg6[%c0_11, %c0_12, %c0_13], %29 {strides = array<i32>} : memref<1x16x128xf32, #tpu.memory_space<vmem>>, vector<1x16x128xf32>,
    return
  }
  func.func @transform_0(%arg0: i32) -> (i32, i32, i32) {
    %c0_i32 = arith.constant 0 : i32
    %c0_i32_0 = arith.constant 0 : i32
    %c0_i32_1 = arith.constant 0 : i32
    return %arg0, %c0_i32, %c0_i32_0 : i32, i32, i32
  }
  func.func @transform_1(%arg0: i32) -> (i32, i32) {
    %c0_i32 = arith.constant 0 : i32
    %c0_i32_0 = arith.constant 0 : i32
    %c0_i32_1 = arith.constant 0 : i32
    return %c0_i32, %c0_i32_0 : i32, i32
  }
  func.func @transform_2(%arg0: i32) -> (i32, i32) {
    %c0_i32 = arith.constant 0 : i32
    %c0_i32_0 = arith.constant 0 : i32
    %c0_i32_1 = arith.constant 0 : i32
    return %c0_i32, %c0_i32_0 : i32, i32
  }
  func.func @transform_3(%arg0: i32) -> (i32, i32) {
    %c0_i32 = arith.constant 0 : i32
    %c0_i32_0 = arith.constant 0 : i32
    %c0_i32_1 = arith.constant 0 : i32
    return %c0_i32, %c0_i32_0 : i32, i32
  }
  func.func @transform_4(%arg0: i32) -> (i32, i32) {
    %c0_i32 = arith.constant 0 : i32
    %c0_i32_0 = arith.constant 0 : i32
    %c0_i32_1 = arith.constant 0 : i32
    return %c0_i32, %c0_i32_0 : i32, i32
  }
  func.func @transform_5(%arg0: i32) -> (i32, i32, i32) {
    %c0_i32 = arith.constant 0 : i32
    %c0_i32_0 = arith.constant 0 : i32
    %c0_i32_1 = arith.constant 0 : i32
    return %arg0, %c0_i32, %c0_i32_0 : i32, i32, i32
  }
}

</mosaic_0001>

<llo_original>
// kernel: tile.19
$region0: #{tile.19}
  %s0 = inlined_call_operand.vmem [shape: f32[2,16,4,16], index: 0, kind: input, shape index: {}]
  %s1 = inlined_call_operand.vmem [shape: f32[2,16,64], index: 1, kind: output, shape index: {}]
  $region1: #{tile.19} parent=0
    #allocation0 [shape = 'u8[131072]{0}', space=vmem, size = 0x20000, scoped, tag = 'scoped mem for input reshape']
    %s3 = sshllo.u32 0, 4
    %s4 = smul.addr 4, 31
    %s5 = scalar_lea.vmem %s0, %s4
    %v6 = vld [vmem:[%s5] sm:%s3]
    %s7 = scalar_lea.vmem [#allocation0], 248
    %8 = vst [vmem:[%s7] sm:%s3] %v6
    %s9 = smul.addr 4, 30
    %s10 = scalar_lea.vmem %s0, %s9
    %v11 = vld [vmem:[%s10] sm:%s3]
    %s12 = scalar_lea.vmem [#allocation0], 240
    %13 = vst [vmem:[%s12] sm:%s3] %v11
    %s14 = smul.addr 4, 29
    %s15 = scalar_lea.vmem %s0, %s14
    %v16 = vld [vmem:[%s15] sm:%s3]
    %s17 = scalar_lea.vmem [#allocation0], 232
    %18 = vst [vmem:[%s17] sm:%s3] %v16
    %s19 = smul.addr 4, 28
    %s20 = scalar_lea.vmem %s0, %s19
    %v21 = vld [vmem:[%s20] sm:%s3]
    %s22 = scalar_lea.vmem [#allocation0], 224
    %23 = vst [vmem:[%s22] sm:%s3] %v21
    %s24 = smul.addr 4, 27
    %s25 = scalar_lea.vmem %s0, %s24
    %v26 = vld [vmem:[%s25] sm:%s3]
    %s27 = scalar_lea.vmem [#allocation0], 216
    %28 = vst [vmem:[%s27] sm:%s3] %v26
    %s29 = smul.addr 4, 26
    %s30 = scalar_lea.vmem %s0, %s29
    %v31 = vld [vmem:[%s30] sm:%s3]
    %s32 = scalar_lea.vmem [#allocation0], 208
    %33 = vst [vmem:[%s32] sm:%s3] %v31
    %s34 = smul.addr 4, 25
    %s35 = scalar_lea.vmem %s0, %s34
    %v36 = vld [vmem:[%s35] sm:%s3]
    %s37 = scalar_lea.vmem [#allocation0], 200
    %38 = vst [vmem:[%s37] sm:%s3] %v36
    %s39 = smul.addr 4, 24
    %s40 = scalar_lea.vmem %s0, %s39
    %v41 = vld [vmem:[%s40] sm:%s3]
    %s42 = scalar_lea.vmem [#allocation0], 192
    %43 = vst [vmem:[%s42] sm:%s3] %v41
    %s44 = smul.addr 4, 23
    %s45 = scalar_lea.vmem %s0, %s44
    %v46 = vld [vmem:[%s45] sm:%s3]
    %s47 = scalar_lea.vmem [#allocation0], 184
    %48 = vst [vmem:[%s47] sm:%s3] %v46
    %s49 = smul.addr 4, 22
    %s50 = scalar_lea.vmem %s0, %s49
    %v51 = vld [vmem:[%s50] sm:%s3]
    %s52 = scalar_lea.vmem [#allocation0], 176
    %53 = vst [vmem:[%s52] sm:%s3] %v51
    %s54 = smul.addr 4, 21
    %s55 = scalar_lea.vmem %s0, %s54
    %v56 = vld [vmem:[%s55] sm:%s3]
    %s57 = scalar_lea.vmem [#allocation0], 168
    %58 = vst [vmem:[%s57] sm:%s3] %v56
    %s59 = smul.addr 4, 20
    %s60 = scalar_lea.vmem %s0, %s59
    %v61 = vld [vmem:[%s60] sm:%s3]
    %s62 = scalar_lea.vmem [#allocation0], 160
    %63 = vst [vmem:[%s62] sm:%s3] %v61
    %s64 = smul.addr 4, 19
    %s65 = scalar_lea.vmem %s0, %s64
    %v66 = vld [vmem:[%s65] sm:%s3]
    %s67 = scalar_lea.vmem [#allocation0], 152
    %68 = vst [vmem:[%s67] sm:%s3] %v66
    %s69 = smul.addr 4, 18
    %s70 = scalar_lea.vmem %s0, %s69
    %v71 = vld [vmem:[%s70] sm:%s3]
    %s72 = scalar_lea.vmem [#allocation0], 144
    %73 = vst [vmem:[%s72] sm:%s3] %v71
    %s74 = smul.addr 4, 17
    %s75 = scalar_lea.vmem %s0, %s74
    %v76 = vld [vmem:[%s75] sm:%s3]
    %s77 = scalar_lea.vmem [#allocation0], 136
    %78 = vst [vmem:[%s77] sm:%s3] %v76
    %s79 = smul.addr 4, 16
    %s80 = scalar_lea.vmem %s0, %s79
    %v81 = vld [vmem:[%s80] sm:%s3]
    %s82 = scalar_lea.vmem [#allocation0], 128
    %83 = vst [vmem:[%s82] sm:%s3] %v81
    %s84 = smul.addr 4, 15
    %s85 = scalar_lea.vmem %s0, %s84
    %v86 = vld [vmem:[%s85] sm:%s3]
    %s87 = scalar_lea.vmem [#allocation0], 120
    %88 = vst [vmem:[%s87] sm:%s3] %v86
    %s89 = smul.addr 4, 14
    %s90 = scalar_lea.vmem %s0, %s89
    %v91 = vld [vmem:[%s90] sm:%s3]
    %s92 = scalar_lea.vmem [#allocation0], 112
    %93 = vst [vmem:[%s92] sm:%s3] %v91
    %s94 = smul.addr 4, 13
    %s95 = scalar_lea.vmem %s0, %s94
    %v96 = vld [vmem:[%s95] sm:%s3]
    %s97 = scalar_lea.vmem [#allocation0], 104
    %98 = vst [vmem:[%s97] sm:%s3] %v96
    %s99 = smul.addr 4, 12
    %s100 = scalar_lea.vmem %s0, %s99
    %v101 = vld [vmem:[%s100] sm:%s3]
    %s102 = scalar_lea.vmem [#allocation0], 96
    %103 = vst [vmem:[%s102] sm:%s3] %v101
    %s104 = smul.addr 4, 11
    %s105 = scalar_lea.vmem %s0, %s104
    %v106 = vld [vmem:[%s105] sm:%s3]
    %s107 = scalar_lea.vmem [#allocation0], 88
    %108 = vst [vmem:[%s107] sm:%s3] %v106
    %s109 = smul.addr 4, 10
    %s110 = scalar_lea.vmem %s0, %s109
    %v111 = vld [vmem:[%s110] sm:%s3]
    %s112 = scalar_lea.vmem [#allocation0], 80
    %113 = vst [vmem:[%s112] sm:%s3] %v111
    %s114 = smul.addr 4, 9
    %s115 = scalar_lea.vmem %s0, %s114
    %v116 = vld [vmem:[%s115] sm:%s3]
    %s117 = scalar_lea.vmem [#allocation0], 72
    %118 = vst [vmem:[%s117] sm:%s3] %v116
    %s119 = smul.addr 4, 8
    %s120 = scalar_lea.vmem %s0, %s119
    %v121 = vld [vmem:[%s120] sm:%s3]
    %s122 = scalar_lea.vmem [#allocation0], 64
    %123 = vst [vmem:[%s122] sm:%s3] %v121
    %s124 = smul.addr 4, 7
    %s125 = scalar_lea.vmem %s0, %s124
    %v126 = vld [vmem:[%s125] sm:%s3]
    %s127 = scalar_lea.vmem [#allocation0], 56
    %128 = vst [vmem:[%s127] sm:%s3] %v126
    %s129 = smul.addr 4, 6
    %s130 = scalar_lea.vmem %s0, %s129
    %v131 = vld [vmem:[%s130] sm:%s3]
    %s132 = scalar_lea.vmem [#allocation0], 48
    %133 = vst [vmem:[%s132] sm:%s3] %v131
    %s134 = smul.addr 4, 5
    %s135 = scalar_lea.vmem %s0, %s134
    %v136 = vld [vmem:[%s135] sm:%s3]
    %s137 = scalar_lea.vmem [#allocation0], 40
    %138 = vst [vmem:[%s137] sm:%s3] %v136
    %s139 = smul.addr 4, 4
    %s140 = scalar_lea.vmem %s0, %s139
    %v141 = vld [vmem:[%s140] sm:%s3]
    %s142 = scalar_lea.vmem [#allocation0], 32
    %143 = vst [vmem:[%s142] sm:%s3] %v141
    %s144 = smul.addr 4, 3
    %s145 = scalar_lea.vmem %s0, %s144
    %v146 = vld [vmem:[%s145] sm:%s3]
    %s147 = scalar_lea.vmem [#allocation0], 24
    %148 = vst [vmem:[%s147] sm:%s3] %v146
    %s149 = smul.addr 4, 2
    %s150 = scalar_lea.vmem %s0, %s149
    %v151 = vld [vmem:[%s150] sm:%s3]
    %s152 = scalar_lea.vmem [#allocation0], 16
    %153 = vst [vmem:[%s152] sm:%s3] %v151
    %s154 = scalar_lea.vmem %s0, 4
    %v155 = vld [vmem:[%s154] sm:%s3]
    %s156 = scalar_lea.vmem [#allocation0], 8
    %157 = vst [vmem:[%s156] sm:%s3] %v155
    %v158 = vld [vmem:[%s0] sm:%s3]
    %159 = vst [vmem:[#allocation0] sm:%s3] %v158
    %v160 = vld [vmem:[#allocation0] ss:$8 sm:$0xf]
    %v161 = vld [vmem:[#allocation0] ss:$8 sm:$0xf0]
    %vm162 = vcmask 1047556
    %v163 = vsel %vm162, %v161, %v160
    %vm164 = vcmask 130048
    %165 = vst.msk [vmem:[%s1] sm:$0xff] %vm164, %v163
    %s166 = scalar_lea.vmem [#allocation0], 64
    %v167 = vld [vmem:[%s166] ss:$8 sm:$0xf]
    %s168 = scalar_lea.vmem [#allocation0], 64
    %v169 = vld [vmem:[%s168] ss:$8 sm:$0xf0]
    %vm170 = vcmask 1047556
    %v171 = vsel %vm170, %v169, %v167
    %vm172 = vcmask 130048
    %s173 = scalar_lea.vmem %s1, 8
    %174 = vst.msk [vmem:[%s173] sm:$0xff] %vm172, %v171
    %s175 = scalar_lea.vmem [#allocation0], 128
    %v176 = vld [vmem:[%s175] ss:$8 sm:$0xf]
    %s177 = scalar_lea.vmem [#allocation0], 128
    %v178 = vld [vmem:[%s177] ss:$8 sm:$0xf0]
    %vm179 = vcmask 1047556
    %v180 = vsel %vm179, %v178, %v176
    %vm181 = vcmask 130048
    %s182 = scalar_lea.vmem %s1, 16
    %183 = vst.msk [vmem:[%s182] sm:$0xff] %vm181, %v180
    %s184 = scalar_lea.vmem [#allocation0], 192
    %v185 = vld [vmem:[%s184] ss:$8 sm:$0xf]
    %s186 = scalar_lea.vmem [#allocation0], 192
    %v187 = vld [vmem:[%s186] ss:$8 sm:$0xf0]
    %vm188 = vcmask 1047556
    %v189 = vsel %vm188, %v187, %v185
    %vm190 = vcmask 130048
    %s191 = scalar_lea.vmem %s1, 24
    %192 = vst.msk [vmem:[%s191] sm:$0xff] %vm190, %v189
    %s193 = scalar_lea.vmem [#allocation0], 3
    %v194 = vld [vmem:[%s193] ss:$8 sm:$0xf]
    %s195 = scalar_lea.vmem [#allocation0], 3
    %v196 = vld [vmem:[%s195] ss:$8 sm:$0xf0]
    %vm197 = vcmask 1047556
    %v198 = vsel %vm197, %v196, %v194
    %199 = vrot.lane.b32.xlu0 %v198, 48
    %v200 = vpop.permute.xlu0 %199
    %vm201 = vcmask 523648
    %202 = vst.msk [vmem:[%s1] sm:$0xff] %vm201, %v200
    %s203 = scalar_lea.vmem [#allocation0], 67
    %v204 = vld [vmem:[%s203] ss:$8 sm:$0xf]
    %s205 = scalar_lea.vmem [#allocation0], 67
    %v206 = vld [vmem:[%s205] ss:$8 sm:$0xf0]
    %vm207 = vcmask 1047556
    %v208 = vsel %vm207, %v206, %v204
    %209 = vrot.lane.b32.xlu0 %v208, 48
    %v210 = vpop.permute.xlu0 %209
    %vm211 = vcmask 523648
    %s212 = scalar_lea.vmem %s1, 8
    %213 = vst.msk [vmem:[%s212] sm:$0xff] %vm211, %v210
    %s214 = scalar_lea.vmem [#allocation0], 131
    %v215 = vld [vmem:[%s214] ss:$8 sm:$0xf]
    %s216 = scalar_lea.vmem [#allocation0], 131
    %v217 = vld [vmem:[%s216] ss:$8 sm:$0xf0]
    %vm218 = vcmask 1047556
    %v219 = vsel %vm218, %v217, %v215
    %220 = vrot.lane.b32.xlu0 %v219, 48
    %v221 = vpop.permute.xlu0 %220
    %vm222 = vcmask 523648
    %s223 = scalar_lea.vmem %s1, 16
    %224 = vst.msk [vmem:[%s223] sm:$0xff] %vm222, %v221
    %s225 = scalar_lea.vmem [#allocation0], 195
    %v226 = vld [vmem:[%s225] ss:$8 sm:$0xf]
    %s227 = scalar_lea.vmem [#allocation0], 195
    %v228 = vld [vmem:[%s227] ss:$8 sm:$0xf0]
    %vm229 = vcmask 1047556
    %v230 = vsel %vm229, %v228, %v226
    %231 = vrot.lane.b32.xlu0 %v230, 48
    %v232 = vpop.permute.xlu0 %231
    %vm233 = vcmask 523648
    %s234 = scalar_lea.vmem %s1, 24
    %235 = vst.msk [vmem:[%s234] sm:$0xff] %vm233, %v232
    %s236 = scalar_lea.vmem [#allocation0], 2
    %v237 = vld [vmem:[%s236] ss:$8 sm:$0xf]
    %s238 = scalar_lea.vmem [#allocation0], 2
    %v239 = vld [vmem:[%s238] ss:$8 sm:$0xf0]
    %vm240 = vcmask 1047556
    %v241 = vsel %vm240, %v239, %v237
    %242 = vrot.lane.b32.xlu0 %v241, 32
    %v243 = vpop.permute.xlu0 %242
    %vm244 = vcmask 392448
    %245 = vst.msk [vmem:[%s1] sm:$0xff] %vm244, %v243
    %s246 = scalar_lea.vmem [#allocation0], 66
    %v247 = vld [vmem:[%s246] ss:$8 sm:$0xf]
    %s248 = scalar_lea.vmem [#allocation0], 66
    %v249 = vld [vmem:[%s248] ss:$8 sm:$0xf0]
    %vm250 = vcmask 1047556
    %v251 = vsel %vm250, %v249, %v247
    %252 = vrot.lane.b32.xlu0 %v251, 32
    %v253 = vpop.permute.xlu0 %252
    %vm254 = vcmask 392448
    %s255 = scalar_lea.vmem %s1, 8
    %256 = vst.msk [vmem:[%s255] sm:$0xff] %vm254, %v253
    %s257 = scalar_lea.vmem [#allocation0], 130
    %v258 = vld [vmem:[%s257] ss:$8 sm:$0xf]
    %s259 = scalar_lea.vmem [#allocation0], 130
    %v260 = vld [vmem:[%s259] ss:$8 sm:$0xf0]
    %vm261 = vcmask 1047556
    %v262 = vsel %vm261, %v260, %v258
    %263 = vrot.lane.b32.xlu0 %v262, 32
    %v264 = vpop.permute.xlu0 %263
    %vm265 = vcmask 392448
    %s266 = scalar_lea.vmem %s1, 16
    %267 = vst.msk [vmem:[%s266] sm:$0xff] %vm265, %v264
    %s268 = scalar_lea.vmem [#allocation0], 194
    %v269 = vld [vmem:[%s268] ss:$8 sm:$0xf]
    %s270 = scalar_lea.vmem [#allocation0], 194
    %v271 = vld [vmem:[%s270] ss:$8 sm:$0xf0]
    %vm272 = vcmask 1047556
    %v273 = vsel %vm272, %v271, %v269
    %274 = vrot.lane.b32.xlu0 %v273, 32
    %v275 = vpop.permute.xlu0 %274
    %vm276 = vcmask 392448
    %s277 = scalar_lea.vmem %s1, 24
    %278 = vst.msk [vmem:[%s277] sm:$0xff] %vm276, %v275
    %s279 = scalar_lea.vmem [#allocation0], 1
    %v280 = vld [vmem:[%s279] ss:$8 sm:$0xf]
    %s281 = scalar_lea.vmem [#allocation0], 1
    %v282 = vld [vmem:[%s281] ss:$8 sm:$0xf0]
    %vm283 = vcmask 1047556
    %v284 = vsel %vm283, %v282, %v280
    %285 = vrot.lane.b32.xlu0 %v284, 16
    %v286 = vpop.permute.xlu0 %285
    %vm287 = vcmask 261248
    %288 = vst.msk [vmem:[%s1] sm:$0xff] %vm287, %v286
    %s289 = scalar_lea.vmem [#allocation0], 65
    %v290 = vld [vmem:[%s289] ss:$8 sm:$0xf]
    %s291 = scalar_lea.vmem [#allocation0], 65
    %v292 = vld [vmem:[%s291] ss:$8 sm:$0xf0]
    %vm293 = vcmask 1047556
    %v294 = vsel %vm293, %v292, %v290
    %295 = vrot.lane.b32.xlu0 %v294, 16
    %v296 = vpop.permute.xlu0 %295
    %vm297 = vcmask 261248
    %s298 = scalar_lea.vmem %s1, 8
    %299 = vst.msk [vmem:[%s298] sm:$0xff] %vm297, %v296
    %s300 = scalar_lea.vmem [#allocation0], 129
    %v301 = vld [vmem:[%s300] ss:$8 sm:$0xf]
    %s302 = scalar_lea.vmem [#allocation0], 129
    %v303 = vld [vmem:[%s302] ss:$8 sm:$0xf0]
    %vm304 = vcmask 1047556
    %v305 = vsel %vm304, %v303, %v301
    %306 = vrot.lane.b32.xlu0 %v305, 16
    %v307 = vpop.permute.xlu0 %306
    %vm308 = vcmask 261248
    %s309 = scalar_lea.vmem %s1, 16
    %310 = vst.msk [vmem:[%s309] sm:$0xff] %vm308, %v307
    %s311 = scalar_lea.vmem [#allocation0], 193
    %v312 = vld [vmem:[%s311] ss:$8 sm:$0xf]
    %s313 = scalar_lea.vmem [#allocation0], 193
    %v314 = vld [vmem:[%s313] ss:$8 sm:$0xf0]
    %vm315 = vcmask 1047556
    %v316 = vsel %vm315, %v314, %v312
    %317 = vrot.lane.b32.xlu0 %v316, 16
    %v318 = vpop.permute.xlu0 %317
    %vm319 = vcmask 261248
    %s320 = scalar_lea.vmem %s1, 24
    %321 = vst.msk [vmem:[%s320] sm:$0xff] %vm319, %v318

// kernel: tile.29
$region0: #{tile.29}
  %s0 = inlined_call_operand.vmem [shape: f32[16,8,16], index: 0, kind: input, shape index: {}]
  %s1 = inlined_call_operand.vmem [shape: f32[16,128], index: 1, kind: output, shape index: {}]
  %v2 = vld [vmem:[%s0] ss:$8 sm:$0xf]
  %v3 = vld [vmem:[%s0] ss:$8 sm:$0xf0]
  %vm4 = vcmask 1047556
  %v5 = vsel %vm4, %v3, %v2
  %vm6 = vcmask 130048
  %7 = vst.msk [vmem:[%s1] sm:$0xff] %vm6, %v5
  %s8 = scalar_lea.vmem %s0, 64
  %v9 = vld [vmem:[%s8] ss:$8 sm:$0xf]
  %s10 = scalar_lea.vmem %s0, 64
  %v11 = vld [vmem:[%s10] ss:$8 sm:$0xf0]
  %vm12 = vcmask 1047556
  %v13 = vsel %vm12, %v11, %v9
  %vm14 = vcmask 130048
  %s15 = scalar_lea.vmem %s1, 8
  %16 = vst.msk [vmem:[%s15] sm:$0xff] %vm14, %v13
  %s17 = scalar_lea.vmem %s0, 7
  %v18 = vld [vmem:[%s17] ss:$8 sm:$0xf]
  %s19 = scalar_lea.vmem %s0, 7
  %v20 = vld [vmem:[%s19] ss:$8 sm:$0xf0]
  %vm21 = vcmask 1047556
  %v22 = vsel %vm21, %v20, %v18
  %23 = vrot.lane.b32.xlu0 %v22, 112
  %v24 = vpop.permute.xlu0 %23
  %vm25 = vcmask 1048448
  %26 = vst.msk [vmem:[%s1] sm:$0xff] %vm25, %v24
  %s27 = scalar_lea.vmem %s0, 71
  %v28 = vld [vmem:[%s27] ss:$8 sm:$0xf]
  %s29 = scalar_lea.vmem %s0, 71
  %v30 = vld [vmem:[%s29] ss:$8 sm:$0xf0]
  %vm31 = vcmask 1047556
  %v32 = vsel %vm31, %v30, %v28
  %33 = vrot.lane.b32.xlu0 %v32, 112
  %v34 = vpop.permute.xlu0 %33
  %vm35 = vcmask 1048448
  %s36 = scalar_lea.vmem %s1, 8
  %37 = vst.msk [vmem:[%s36] sm:$0xff] %vm35, %v34
  %s38 = scalar_lea.vmem %s0, 6
  %v39 = vld [vmem:[%s38] ss:$8 sm:$0xf]
  %s40 = scalar_lea.vmem %s0, 6
  %v41 = vld [vmem:[%s40] ss:$8 sm:$0xf0]
  %vm42 = vcmask 1047556
  %v43 = vsel %vm42, %v41, %v39
  %44 = vrot.lane.b32.xlu0 %v43, 96
  %v45 = vpop.permute.xlu0 %44
  %vm46 = vcmask 917248
  %47 = vst.msk [vmem:[%s1] sm:$0xff] %vm46, %v45
  %s48 = scalar_lea.vmem %s0, 70
  %v49 = vld [vmem:[%s48] ss:$8 sm:$0xf]
  %s50 = scalar_lea.vmem %s0, 70
  %v51 = vld [vmem:[%s50] ss:$8 sm:$0xf0]
  %vm52 = vcmask 1047556
  %v53 = vsel %vm52, %v51, %v49
  %54 = vrot.lane.b32.xlu0 %v53, 96
  %v55 = vpop.permute.xlu0 %54
  %vm56 = vcmask 917248
  %s57 = scalar_lea.vmem %s1, 8
  %58 = vst.msk [vmem:[%s57] sm:$0xff] %vm56, %v55
  %s59 = scalar_lea.vmem %s0, 5
  %v60 = vld [vmem:[%s59] ss:$8 sm:$0xf]
  %s61 = scalar_lea.vmem %s0, 5
  %v62 = vld [vmem:[%s61] ss:$8 sm:$0xf0]
  %vm63 = vcmask 1047556
  %v64 = vsel %vm63, %v62, %v60
  %65 = vrot.lane.b32.xlu0 %v64, 80
  %v66 = vpop.permute.xlu0 %65
  %vm67 = vcmask 786048
  %68 = vst.msk [vmem:[%s1] sm:$0xff] %vm67, %v66
  %s69 = scalar_lea.vmem %s0, 69
  %v70 = vld [vmem:[%s69] ss:$8 sm:$0xf]
  %s71 = scalar_lea.vmem %s0, 69
  %v72 = vld [vmem:[%s71] ss:$8 sm:$0xf0]
  %vm73 = vcmask 1047556
  %v74 = vsel %vm73, %v72, %v70
  %75 = vrot.lane.b32.xlu0 %v74, 80
  %v76 = vpop.permute.xlu0 %75
  %vm77 = vcmask 786048
  %s78 = scalar_lea.vmem %s1, 8
  %79 = vst.msk [vmem:[%s78] sm:$0xff] %vm77, %v76
  %s80 = scalar_lea.vmem %s0, 4
  %v81 = vld [vmem:[%s80] ss:$8 sm:$0xf]
  %s82 = scalar_lea.vmem %s0, 4
  %v83 = vld [vmem:[%s82] ss:$8 sm:$0xf0]
  %vm84 = vcmask 1047556
  %v85 = vsel %vm84, %v83, %v81
  %86 = vrot.lane.b32.xlu0 %v85, 64
  %v87 = vpop.permute.xlu0 %86
  %vm88 = vcmask 654848
  %89 = vst.msk [vmem:[%s1] sm:$0xff] %vm88, %v87
  %s90 = scalar_lea.vmem %s0, 68
  %v91 = vld [vmem:[%s90] ss:$8 sm:$0xf]
  %s92 = scalar_lea.vmem %s0, 68
  %v93 = vld [vmem:[%s92] ss:$8 sm:$0xf0]
  %vm94 = vcmask 1047556
  %v95 = vsel %vm94, %v93, %v91
  %96 = vrot.lane.b32.xlu0 %v95, 64
  %v97 = vpop.permute.xlu0 %96
  %vm98 = vcmask 654848
  %s99 = scalar_lea.vmem %s1, 8
  %100 = vst.msk [vmem:[%s99] sm:$0xff] %vm98, %v97
  %s101 = scalar_lea.vmem %s0, 3
  %v102 = vld [vmem:[%s101] ss:$8 sm:$0xf]
  %s103 = scalar_lea.vmem %s0, 3
  %v104 = vld [vmem:[%s103] ss:$8 sm:$0xf0]
  %vm105 = vcmask 1047556
  %v106 = vsel %vm105, %v104, %v102
  %107 = vrot.lane.b32.xlu0 %v106, 48
  %v108 = vpop.permute.xlu0 %107
  %vm109 = vcmask 523648
  %110 = vst.msk [vmem:[%s1] sm:$0xff] %vm109, %v108
  %s111 = scalar_lea.vmem %s0, 67
  %v112 = vld [vmem:[%s111] ss:$8 sm:$0xf]
  %s113 = scalar_lea.vmem %s0, 67
  %v114 = vld [vmem:[%s113] ss:$8 sm:$0xf0]
  %vm115 = vcmask 1047556
  %v116 = vsel %vm115, %v114, %v112
  %117 = vrot.lane.b32.xlu0 %v116, 48
  %v118 = vpop.permute.xlu0 %117
  %vm119 = vcmask 523648
  %s120 = scalar_lea.vmem %s1, 8
  %121 = vst.msk [vmem:[%s120] sm:$0xff] %vm119, %v118
  %s122 = scalar_lea.vmem %s0, 2
  %v123 = vld [vmem:[%s122] ss:$8 sm:$0xf]
  %s124 = scalar_lea.vmem %s0, 2
  %v125 = vld [vmem:[%s124] ss:$8 sm:$0xf0]
  %vm126 = vcmask 1047556
  %v127 = vsel %vm126, %v125, %v123
  %128 = vrot.lane.b32.xlu0 %v127, 32
  %v129 = vpop.permute.xlu0 %128
  %vm130 = vcmask 392448
  %131 = vst.msk [vmem:[%s1] sm:$0xff] %vm130, %v129
  %s132 = scalar_lea.vmem %s0, 66
  %v133 = vld [vmem:[%s132] ss:$8 sm:$0xf]
  %s134 = scalar_lea.vmem %s0, 66
  %v135 = vld [vmem:[%s134] ss:$8 sm:$0xf0]
  %vm136 = vcmask 1047556
  %v137 = vsel %vm136, %v135, %v133
  %138 = vrot.lane.b32.xlu0 %v137, 32
  %v139 = vpop.permute.xlu0 %138
  %vm140 = vcmask 392448
  %s141 = scalar_lea.vmem %s1, 8
  %142 = vst.msk [vmem:[%s141] sm:$0xff] %vm140, %v139
  %s143 = scalar_lea.vmem %s0, 1
  %v144 = vld [vmem:[%s143] ss:$8 sm:$0xf]
  %s145 = scalar_lea.vmem %s0, 1
  %v146 = vld [vmem:[%s145] ss:$8 sm:$0xf0]
  %vm147 = vcmask 1047556
  %v148 = vsel %vm147, %v146, %v144
  %149 = vrot.lane.b32.xlu0 %v148, 16
  %v150 = vpop.permute.xlu0 %149
  %vm151 = vcmask 261248
  %152 = vst.msk [vmem:[%s1] sm:$0xff] %vm151, %v150
  %s153 = scalar_lea.vmem %s0, 65
  %v154 = vld [vmem:[%s153] ss:$8 sm:$0xf]
  %s155 = scalar_lea.vmem %s0, 65
  %v156 = vld [vmem:[%s155] ss:$8 sm:$0xf0]
  %vm157 = vcmask 1047556
  %v158 = vsel %vm157, %v156, %v154
  %159 = vrot.lane.b32.xlu0 %v158, 16
  %v160 = vpop.permute.xlu0 %159
  %vm161 = vcmask 261248
  %s162 = scalar_lea.vmem %s1, 8
  %163 = vst.msk [vmem:[%s162] sm:$0xff] %vm161, %v160

// kernel: neg.1
$region0: #{neg.1}
  #allocation0 [shape = 's32[1]{0}', space=sflag, size = 0x4, scoped, tag = 'scoped memory for neg.1']
  %s0 = inlined_call_operand.vmem [shape: f32[16,16], index: 0, kind: input, shape index: {}]
  %s1 = inlined_call_operand.vmem [shape: f32[16,16], index: 1, kind: output, shape index: {}]
  %v2 = vld [vmem:[%s0] sm:$0xff]
  %3 = xla_tuple %v2
  %4 = xla_tuple %3
  %v5 = vxor.u32 %v2, 2147483648
  %6 = xla_tuple %v5
  %7 = vst [vmem:[%s1] sm:$0xff] %v5
  %s8 = scalar_lea.vmem %s0, 8
  %v9 = vld [vmem:[%s8] sm:$0xff]
  %10 = xla_tuple %v9
  %11 = xla_tuple %10
  %v12 = vxor.u32 %v9, 2147483648
  %13 = xla_tuple %v12
  %s14 = scalar_lea.vmem %s1, 8
  %15 = vst [vmem:[%s14] sm:$0xff] %v12

// kernel: encode_forward.1
$region0: #{encode_forward.1}
  #allocation0 [shape = 'u32[]', space=smem, size = 0x4, offset = 0x4, fixed_abs, tag = 'smem constant byte address 0x4 - core index']
  #allocation1 [shape = 'u32[144,128]{1,0:T(1,128)}', space=vmem, size = 0x12000, scoped, tag = 'internal scratch']
  %s0 = inlined_call_operand.vmem [shape: f32[2,32,64], index: 0, kind: input, shape index: {}]
  %s1 = inlined_call_operand.vmem [shape: f32[32,64], index: 1, kind: input, shape index: {}]
  %s2 = inlined_call_operand.vmem [shape: f32[32,32], index: 2, kind: input, shape index: {}]
  %s3 = inlined_call_operand.vmem [shape: f32[64,128], index: 3, kind: input, shape index: {}]
  %s4 = inlined_call_operand.vmem [shape: f32[16,128], index: 4, kind: input, shape index: {}]
  %s5 = inlined_call_operand.vmem [shape: f32[2,16,128], index: 5, kind: output, shape index: {}]
  %s6 = sld [smem:[#allocation0]]
  $region53: #{encode_forward.1} parent=0
    _
  %s8 = ssub.s32 1, %s6
  %s9 = scalar_select 0, %s8, %s6
  loop: start=0, step=1, limit=4
  $region2: #{encode_forward.1} parent=0 // loop_pre_header
    _
  $region3: #{encode_forward.1} parent=0 // loop_header
    %s11 = sphi 0, %s15
    %p12 = scmp.ge.s32.totalorder %s11, 4
    %s21 = sphi 0, %s23
    %s24 = sphi 0, %s21
    %s25 = sphi 0, %s24
    %s41 = sphi 0, %s25
    %s45 = sphi 0, %s45
    %s47 = sphi 0, %s45
    %s48 = sphi 0, %s47
    %s62 = sphi 0, %s48
    %s66 = sphi 0, %s66
    %s68 = sphi 0, %s66
    %s69 = sphi 0, %s68
    %s83 = sphi 0, %s69
    %s87 = sphi 0, %s87
    %s89 = sphi 0, %s87
    %s90 = sphi 0, %s89
    %s104 = sphi 0, %s90
    %s108 = sphi 0, %s108
    %s110 = sphi 0, %s108
    %s111 = sphi 0, %s110
    %s125 = sphi 0, %s111
    %s131 = sphi 0, %s133
    %s134 = sphi 0, %s131
    %s135 = sphi 0, %s134
    %s151 = sphi 0, %s135
  $region4: #{encode_forward.1} parent=0 // loop_header_branch
    %14 = sbr.rel (%p12) target = $region8
  $region5: #{encode_forward.1} parent=0 // loop_body
    %s16 = ssub.s32 %s11, 1
    %s17 = ssub.s32 %s11, 2
    %s18 = sadd.s32 %s11, 1
    %s19 = ssub.s32 %s11, %s18
    %p20 = scmp.eq.s32.totalorder %s19, 0
    %s22 = sadd.s32 %s21, 1
    %s23 = scalar_select %p20, %s21, %s22
    %p26 = pneg %p20
    %p27 = scmp.eq.s32.totalorder %s11, 1
    %p28 = por %p26, %p27
    %p29 = scmp.ne.s32.totalorder %s21, %s24
    %p30 = scmp.eq.s32.totalorder %s11, 0
    %p31 = por %p29, %p30
    %p32 = scmp.ne.s32.totalorder %s21, %s24
    %p33 = scmp.eq.s32.totalorder %s16, 1
    %p34 = por %p32, %p33
    %p35 = scmp.ne.s32.totalorder %s24, %s25
    %p36 = scmp.eq.s32.totalorder %s16, 0
    %p37 = por %p35, %p36
    %p38 = scmp.ne.s32.totalorder %s24, %s25
    %p39 = scmp.eq.s32.totalorder %s17, 1
    %p40 = por %p38, %p39
    %p42 = scmp.ne.s32.totalorder %s25, %s41
    %p43 = scmp.eq.s32.totalorder %s17, 0
    %p44 = por %p42, %p43
    %s46 = sadd.s32 %s45, 1
    %p49 = scmp.eq.s32.totalorder %s11, 1
    %p50 = scmp.ne.s32.totalorder %s45, %s47
    %p51 = scmp.eq.s32.totalorder %s11, 0
    %p52 = por %p50, %p51
    %p53 = scmp.ne.s32.totalorder %s45, %s47
    %p54 = scmp.eq.s32.totalorder %s16, 1
    %p55 = por %p53, %p54
    %p56 = scmp.ne.s32.totalorder %s47, %s48
    %p57 = scmp.eq.s32.totalorder %s16, 0
    %p58 = por %p56, %p57
    %p59 = scmp.ne.s32.totalorder %s47, %s48
    %p60 = scmp.eq.s32.totalorder %s17, 1
    %p61 = por %p59, %p60
    %p63 = scmp.ne.s32.totalorder %s48, %s62
    %p64 = scmp.eq.s32.totalorder %s17, 0
    %p65 = por %p63, %p64
    %s67 = sadd.s32 %s66, 1
    %p70 = scmp.eq.s32.totalorder %s11, 1
    %p71 = scmp.ne.s32.totalorder %s66, %s68
    %p72 = scmp.eq.s32.totalorder %s11, 0
    %p73 = por %p71, %p72
    %p74 = scmp.ne.s32.totalorder %s66, %s68
    %p75 = scmp.eq.s32.totalorder %s16, 1
    %p76 = por %p74, %p75
    %p77 = scmp.ne.s32.totalorder %s68, %s69
    %p78 = scmp.eq.s32.totalorder %s16, 0
    %p79 = por %p77, %p78
    %p80 = scmp.ne.s32.totalorder %s68, %s69
    %p81 = scmp.eq.s32.totalorder %s17, 1
    %p82 = por %p80, %p81
    %p84 = scmp.ne.s32.totalorder %s69, %s83
    %p85 = scmp.eq.s32.totalorder %s17, 0
    %p86 = por %p84, %p85
    %s88 = sadd.s32 %s87, 1
    %p91 = scmp.eq.s32.totalorder %s11, 1
    %p92 = scmp.ne.s32.totalorder %s87, %s89
    %p93 = scmp.eq.s32.totalorder %s11, 0
    %p94 = por %p92, %p93
    %p95 = scmp.ne.s32.totalorder %s87, %s89
    %p96 = scmp.eq.s32.totalorder %s16, 1
    %p97 = por %p95, %p96
    %p98 = scmp.ne.s32.totalorder %s89, %s90
    %p99 = scmp.eq.s32.totalorder %s16, 0
    %p100 = por %p98, %p99
    %p101 = scmp.ne.s32.totalorder %s89, %s90
    %p102 = scmp.eq.s32.totalorder %s17, 1
    %p103 = por %p101, %p102
    %p105 = scmp.ne.s32.totalorder %s90, %s104
    %p106 = scmp.eq.s32.totalorder %s17, 0
    %p107 = por %p105, %p106
    %s109 = sadd.s32 %s108, 1
    %p112 = scmp.eq.s32.totalorder %s11, 1
    %p113 = scmp.ne.s32.totalorder %s108, %s110
    %p114 = scmp.eq.s32.totalorder %s11, 0
    %p115 = por %p113, %p114
    %p116 = scmp.ne.s32.totalorder %s108, %s110
    %p117 = scmp.eq.s32.totalorder %s16, 1
    %p118 = por %p116, %p117
    %p119 = scmp.ne.s32.totalorder %s110, %s111
    %p120 = scmp.eq.s32.totalorder %s16, 0
    %p121 = por %p119, %p120
    %p122 = scmp.ne.s32.totalorder %s110, %s111
    %p123 = scmp.eq.s32.totalorder %s17, 1
    %p124 = por %p122, %p123
    %p126 = scmp.ne.s32.totalorder %s111, %s125
    %p127 = scmp.eq.s32.totalorder %s17, 0
    %p128 = por %p126, %p127
    %s129 = ssub.s32 %s11, %s18
    %p130 = scmp.eq.s32.totalorder %s129, 0
    %s132 = sadd.s32 %s131, 1
    %s133 = scalar_select %p130, %s131, %s132
    %p136 = pneg %p130
    %p137 = scmp.eq.s32.totalorder %s11, 1
    %p138 = por %p136, %p137
    %p139 = scmp.ne.s32.totalorder %s131, %s134
    %p140 = scmp.eq.s32.totalorder %s11, 0
    %p141 = por %p139, %p140
    %p142 = scmp.ne.s32.totalorder %s131, %s134
    %p143 = scmp.eq.s32.totalorder %s16, 1
    %p144 = por %p142, %p143
    %p145 = scmp.ne.s32.totalorder %s134, %s135
    %p146 = scmp.eq.s32.totalorder %s16, 0
    %p147 = por %p145, %p146
    %p148 = scmp.ne.s32.totalorder %s134, %s135
    %p149 = scmp.eq.s32.totalorder %s17, 1
    %p150 = por %p148, %p149
    %p152 = scmp.ne.s32.totalorder %s135, %s151
    %p153 = scmp.eq.s32.totalorder %s17, 0
    %p154 = por %p152, %p153
    %p155 = scmp.le.s32.totalorder 1, %s11
    %p156 = scmp.lt.s32.totalorder %s11, 3
    %p157 = pnand %p155, %p156
    %p158 = pneg %p157
    // Predicated region
    $region9: #{encode_forward.1} parent=5 // pred_check
      _
    $region10: #{encode_forward.1} parent=5 // pred_check_branch
      %160 = sbr.rel (%p157) target = $region12
    $region11: #{encode_forward.1} parent=5 // pred_region
      %s161 = ssub.s32 %s11, 1
      // Predicated region
      $region13: #{encode_forward.1} parent=11 // pred_check
        %p162 = pneg %p58
      $region14: #{encode_forward.1} parent=11 // pred_check_branch
        %164 = sbr.rel (%p162) target = $region16
      $region15: #{encode_forward.1} parent=11 // pred_region
        _
      $region16: #{encode_forward.1} parent=11 // pred_fallthru
        _
      // Predicated region
      $region17: #{encode_forward.1} parent=11 // pred_check
        %p165 = pneg %p79
      $region18: #{encode_forward.1} parent=11 // pred_check_branch
        %167 = sbr.rel (%p165) target = $region20
      $region19: #{encode_forward.1} parent=11 // pred_region
        _
      $region20: #{encode_forward.1} parent=11 // pred_fallthru
        _
      // Predicated region
      $region21: #{encode_forward.1} parent=11 // pred_check
        %p168 = pneg %p100
      $region22: #{encode_forward.1} parent=11 // pred_check_branch
        %170 = sbr.rel (%p168) target = $region24
      $region23: #{encode_forward.1} parent=11 // pred_region
        _
      $region24: #{encode_forward.1} parent=11 // pred_fallthru
        _
      // Predicated region
      $region25: #{encode_forward.1} parent=11 // pred_check
        %p171 = pneg %p121
      $region26: #{encode_forward.1} parent=11 // pred_check_branch
        %173 = sbr.rel (%p171) target = $region28
      $region27: #{encode_forward.1} parent=11 // pred_region
        _
      $region28: #{encode_forward.1} parent=11 // pred_fallthru
        _
    $region12: #{encode_forward.1} parent=5 // pred_fallthru
      _
    %p174 = scmp.lt.s32.totalorder %s11, 2
    // Predicated region
    $region29: #{encode_forward.1} parent=5 // pred_check
      %p175 = pneg %p174
    $region30: #{encode_forward.1} parent=5 // pred_check_branch
      %177 = sbr.rel (%p175) target = $region32
    $region31: #{encode_forward.1} parent=5 // pred_region
      // Predicated region
      $region33: #{encode_forward.1} parent=31 // pred_check
        %p178 = pneg %p31
      $region34: #{encode_forward.1} parent=31 // pred_check_branch
        %180 = sbr.rel (%p178) target = $region36
      $region35: #{encode_forward.1} parent=31 // pred_region
        %p181 = scmp.lt.s32.totalorder %s11, 1
        %s182 = scalar_select %p181, %s11, 1
        %s183 = smul.addr %s182, 4
        %s184 = smul.addr %s183, 8
        %s185 = scalar_lea.vmem %s0, %s184
      $region36: #{encode_forward.1} parent=31 // pred_fallthru
        _
    $region32: #{encode_forward.1} parent=5 // pred_fallthru
      _
    %p186 = scmp.le.s32.totalorder 1, %s11
    %p187 = scmp.lt.s32.totalorder %s11, 3
    %p188 = pnand %p186, %p187
    %p189 = pneg %p188
    // Predicated region
    $region37: #{encode_forward.1} parent=5 // pred_check
      _
    $region38: #{encode_forward.1} parent=5 // pred_check_branch
      %191 = sbr.rel (%p188) target = $region40
    $region39: #{encode_forward.1} parent=5 // pred_region
      %s192 = ssub.s32 %s11, 1
      %p193 = scmp.lt.s32.totalorder %s16, 1
      %s194 = scalar_select %p193, %s16, 1
      %s195 = smul.addr %s194, 4
      %s196 = smul.addr %s195, 8
      %s197 = scalar_lea.vmem %s0, %s196
      %p198 = pneg %p37
      %p199 = pneg %p34
      %p200 = pneg %p58
      %p201 = pneg %p55
      %p202 = pneg %p79
      %p203 = pneg %p76
      %p204 = pneg %p100
      %p205 = pneg %p97
      %p206 = pneg %p121
      %p207 = pneg %p118
      %p208 = pneg %p147
      %p209 = pneg %p144
      %p210 = scmp.lt.s32.totalorder %s16, 1
      %s211 = scalar_select %p210, %s16, 1
      %s212 = smul.addr %s211, 2
      %s213 = smul.addr %s212, 8
      %s214 = scalar_lea.vmem %s5, %s213
      %p215 = scmp.lt.s32.totalorder %s16, 1
      %s216 = scalar_select %p215, %s16, 1
      %s217 = smul.addr %s216, 4
      %s218 = smul.addr %s217, 8
      %s219 = scalar_lea.vmem %s0, %s218
      %p220 = scmp.lt.s32.totalorder %s16, 1
      %s221 = scalar_select %p220, %s16, 1
      %s222 = smul.addr %s221, 2
      %s223 = smul.addr %s222, 8
      %s224 = scalar_lea.vmem %s5, %s223
      %v225 = vld [vmem:[%s219] sm:$0xff]
      %v226 = vld [vmem:[%s219 + $0x8] sm:$0xff]
      %v227 = vld [vmem:[%s219 + $0x10] sm:$0xff]
      %v228 = vld [vmem:[%s219 + $0x18] sm:$0xff]
      %v229 = vld [vmem:[%s1] sm:$0xff]
      %v230 = vld [vmem:[%s1 + $0x8] sm:$0xff]
      %v231 = vld [vmem:[%s1 + $0x10] sm:$0xff]
      %v232 = vld [vmem:[%s1 + $0x18] sm:$0xff]
      %v233 = vmul.f32 %v229, %v225
      %v234 = vmul.f32 %v230, %v226
      %v235 = vmul.f32 %v231, %v227
      %v236 = vmul.f32 %v232, %v228
      %v237 = vsub.f32 %v233, %v235
      %v238 = vsub.f32 %v234, %v236
      %v239 = vmul.f32 %v229, %v227
      %v240 = vmul.f32 %v230, %v228
      %v241 = vmul.f32 %v231, %v225
      %v242 = vmul.f32 %v232, %v226
      %v243 = vadd.f32 %v239, %v241
      %v244 = vadd.f32 %v240, %v242
      %v245 = vld [vmem:[%s2] sm:$0xff]
      %v246 = vld [vmem:[%s2 + $0x8] sm:$0xff]
      %v247 = vld [vmem:[%s2 + $0x10] sm:$0xff]
      %v248 = vld [vmem:[%s2 + $0x18] sm:$0xff]
      %vm249 = vcmask 261120
      %v251 = vsel %vm249, %v245, 0
      %v254 = vsel %vm249, %v246, 0
      %v257 = vsel %vm249, %v247, 0
      %v260 = vsel %vm249, %v248, 0
      %262 = vmatprep.subr.mxu0 0.0
      %263 = vmatpush1.msra.mxu0 %v237
      %264 = vmatprep.subr.mxu0 0.0
      %265 = vmatpush1.msra.mxu0 %v238
      %266 = vmatprep.subr.mxu0 0.0
      %267 = vmatpush1.msra.mxu0 %v243
      %268 = vmatprep.subr.mxu0 0.0
      %269 = vmatpush1.msra.mxu0 %v244
      %270 = vmatprep.subr.mxu0 0.0
      %271 = vmatpush1.msra.mxu0 0.0
      %272 = vmatprep.subr.mxu0 0.0
      %273 = vmatpush1.msra.mxu0 0.0
      %274 = vmatprep.subr.mxu0 0.0
      %275 = vmatpush1.msra.mxu0 0.0
      %276 = vmatprep.subr.mxu0 0.0
      %277 = vmatpush1.msra.mxu0 0.0
      %278 = vmatprep.subr.mxu0 0.0
      %279 = vmatpush1.msra.mxu0 0.0
      %280 = vmatprep.subr.mxu0 0.0
      %281 = vmatpush1.msra.mxu0 0.0
      %282 = vmatprep.subr.mxu0 0.0
      %283 = vmatpush1.msra.mxu0 0.0
      %284 = vmatprep.subr.mxu0 0.0
      %285 = vmatpush1.msra.mxu0 0.0
      %286 = vmatprep.subr.mxu0 0.0
      %287 = vmatpush1.msra.mxu0 0.0
      %288 = vmatprep.subr.mxu0 0.0
      %289 = vmatpush1.msra.mxu0 0.0
      %290 = vmatprep.subr.mxu0 0.0
      %291 = vmatpush1.msra.mxu0 0.0
      %292 = vmatprep.subr.mxu0 0.0
      %293 = vmatpush1.msra.mxu0 0.0
      %294 = vmatprep.subr.mxu0 0.0
      %295 = vmatpush1.msra.mxu0 0.0
      %296 = vmatprep.subr.mxu0 0.0
      %297 = vmatpush1.msra.mxu0 0.0
      %298 = vmatprep.subr.mxu0 0.0
      %299 = vmatpush1.msra.mxu0 0.0
      %300 = vmatprep.subr.mxu0 0.0
      %301 = vmatpush1.msra.mxu0 0.0
      %302 = vmatprep.subr.mxu0 0.0
      %303 = vmatpush1.msra.mxu0 0.0
      %304 = vmatprep.subr.mxu0 0.0
      %305 = vmatpush1.msra.mxu0 0.0
      %306 = vmatprep.subr.mxu0 0.0
      %307 = vmatpush1.msra.mxu0 0.0
      %308 = vmatprep.subr.mxu0 0.0
      %309 = vmatpush1.msra.mxu0 0.0
      %310 = vmatprep.subr.mxu0 0.0
      %311 = vmatpush1.msra.mxu0 0.0
      %312 = vmatprep.subr.mxu0 0.0
      %313 = vmatpush1.msra.mxu0 0.0
      %314 = vmatprep.subr.mxu0 0.0
      %315 = vmatpush1.msra.mxu0 0.0
      %316 = vmatprep.subr.mxu0 0.0
      %317 = vmatpush1.msra.mxu0 0.0
      %318 = vmatprep.subr.mxu0 0.0
      %319 = vmatpush1.msra.mxu0 0.0
      %320 = vmatprep.subr.mxu0 0.0
      %321 = vmatpush1.msra.mxu0 0.0
      %322 = vmatprep.subr.mxu0 0.0
      %323 = vmatpush1.msra.mxu0 0.0
      %324 = vmatprep.subr.mxu0 0.0
      %325 = vmatpush1.msra.mxu0 0.0
      %326 = vmatprep.mubr.f32.mxu0 0.0
      %327 = vmatmul.mubr.f32.gmra.mrb[0].mxu0 %v251
      %v328 = vpop.f32.mrb[0].mxu0
      %v329 = vadd.f32 0.0, %v328
      %v330 = vpop.f32.mrb[0].mxu0
      %331 = vmatprep.mubr.f32.mxu0 0.0
      %332 = vmatmul.mubr.f32.gmra.mrb[0].mxu0 %v254
      %v333 = vpop.f32.mrb[0].mxu0
      %v334 = vadd.f32 0.0, %v333
      %v335 = vpop.f32.mrb[0].mxu0
      %336 = vmatprep.mubr.f32.mxu0 0.0
      %337 = vmatmul.mubr.f32.gmra.mrb[0].mxu0 %v257
      %v338 = vpop.f32.mrb[0].mxu0
      %v339 = vadd.f32 0.0, %v338
      %v340 = vpop.f32.mrb[0].mxu0
      %341 = vmatprep.mubr.f32.mxu0 0.0
      %342 = vmatmul.mubr.f32.gmra.mrb[0].mxu0 %v260
      %v343 = vpop.f32.mrb[0].mxu0
      %v344 = vadd.f32 0.0, %v343
      %v345 = vpop.f32.mrb[0].mxu0
      %346 = vdwg.mxu0
      %v347 = vld [vmem:[%s3] sm:$0xff]
      %v348 = vld [vmem:[%s3 + $0x8] sm:$0xff]
      %v349 = vld [vmem:[%s3 + $0x10] sm:$0xff]
      %v350 = vld [vmem:[%s3 + $0x18] sm:$0xff]
      %v351 = vld [vmem:[%s3 + $0x20] sm:$0xff]
      %v352 = vld [vmem:[%s3 + $0x28] sm:$0xff]
      %v353 = vld [vmem:[%s3 + $0x30] sm:$0xff]
      %v354 = vld [vmem:[%s3 + $0x38] sm:$0xff]
      %vm355 = vcmask 523264
      %v357 = vsel %vm355, %v329, 0
      %v360 = vsel %vm355, %v334, 0
      %v363 = vsel %vm355, %v339, 0
      %v366 = vsel %vm355, %v344, 0
      %368 = vmatprep.subr.mxu0 0.0
      %369 = vmatpush1.msra.mxu0 %v347
      %370 = vmatprep.subr.mxu0 0.0
      %371 = vmatpush1.msra.mxu0 %v348
      %372 = vmatprep.subr.mxu0 0.0
      %373 = vmatpush1.msra.mxu0 %v349
      %374 = vmatprep.subr.mxu0 0.0
      %375 = vmatpush1.msra.mxu0 %v350
      %376 = vmatprep.subr.mxu0 0.0
      %377 = vmatpush1.msra.mxu0 %v351
      %378 = vmatprep.subr.mxu0 0.0
      %379 = vmatpush1.msra.mxu0 %v352
      %380 = vmatprep.subr.mxu0 0.0
      %381 = vmatpush1.msra.mxu0 %v353
      %382 = vmatprep.subr.mxu0 0.0
      %383 = vmatpush1.msra.mxu0 %v354
      %384 = vmatprep.subr.mxu0 0.0
      %385 = vmatpush1.msra.mxu0 0.0
      %386 = vmatprep.subr.mxu0 0.0
      %387 = vmatpush1.msra.mxu0 0.0
      %388 = vmatprep.subr.mxu0 0.0
      %389 = vmatpush1.msra.mxu0 0.0
      %390 = vmatprep.subr.mxu0 0.0
      %391 = vmatpush1.msra.mxu0 0.0
      %392 = vmatprep.subr.mxu0 0.0
      %393 = vmatpush1.msra.mxu0 0.0
      %394 = vmatprep.subr.mxu0 0.0
      %395 = vmatpush1.msra.mxu0 0.0
      %396 = vmatprep.subr.mxu0 0.0
      %397 = vmatpush1.msra.mxu0 0.0
      %398 = vmatprep.subr.mxu0 0.0
      %399 = vmatpush1.msra.mxu0 0.0
      %400 = vmatprep.subr.mxu0 0.0
      %401 = vmatpush1.msra.mxu0 0.0
      %402 = vmatprep.subr.mxu0 0.0
      %403 = vmatpush1.msra.mxu0 0.0
      %404 = vmatprep.subr.mxu0 0.0
      %405 = vmatpush1.msra.mxu0 0.0
      %406 = vmatprep.subr.mxu0 0.0
      %407 = vmatpush1.msra.mxu0 0.0
      %408 = vmatprep.subr.mxu0 0.0
      %409 = vmatpush1.msra.mxu0 0.0
      %410 = vmatprep.subr.mxu0 0.0
      %411 = vmatpush1.msra.mxu0 0.0
      %412 = vmatprep.subr.mxu0 0.0
      %413 = vmatpush1.msra.mxu0 0.0
      %414 = vmatprep.subr.mxu0 0.0
      %415 = vmatpush1.msra.mxu0 0.0
      %416 = vmatprep.subr.mxu0 0.0
      %417 = vmatpush1.msra.mxu0 0.0
      %418 = vmatprep.subr.mxu0 0.0
      %419 = vmatpush1.msra.mxu0 0.0
      %420 = vmatprep.subr.mxu0 0.0
      %421 = vmatpush1.msra.mxu0 0.0
      %422 = vmatprep.subr.mxu0 0.0
      %423 = vmatpush1.msra.mxu0 0.0
      %424 = vmatprep.subr.mxu0 0.0
      %425 = vmatpush1.msra.mxu0 0.0
      %426 = vmatprep.subr.mxu0 0.0
      %427 = vmatpush1.msra.mxu0 0.0
      %428 = vmatprep.subr.mxu0 0.0
      %429 = vmatpush1.msra.mxu0 0.0
      %430 = vmatprep.subr.mxu0 0.0
      %431 = vmatpush1.msra.mxu0 0.0
      %432 = vmatprep.mubr.f32.mxu0 0.0
      %433 = vmatmul.mubr.f32.gmra.mrb[0].mxu0 %v357
      %v434 = vpop.f32.mrb[0].mxu0
      %v435 = vadd.f32 0.0, %v434
      %v436 = vpop.f32.mrb[0].mxu0
      %437 = vmatprep.mubr.f32.mxu0 0.0
      %438 = vmatmul.mubr.f32.gmra.mrb[0].mxu0 %v360
      %v439 = vpop.f32.mrb[0].mxu0
      %v440 = vadd.f32 0.0, %v439
      %v441 = vpop.f32.mrb[0].mxu0
      %442 = vmatprep.mubr.f32.mxu0 0.0
      %443 = vmatmul.mubr.f32.gmra.mrb[0].mxu0 %v363
      %v444 = vpop.f32.mrb[0].mxu0
      %v445 = vadd.f32 0.0, %v444
      %v446 = vpop.f32.mrb[0].mxu0
      %447 = vmatprep.mubr.f32.mxu0 0.0
      %448 = vmatmul.mubr.f32.gmra.mrb[0].mxu0 %v366
      %v449 = vpop.f32.mrb[0].mxu0
      %v450 = vadd.f32 0.0, %v449
      %v451 = vpop.f32.mrb[0].mxu0
      %452 = vdwg.mxu0
      %455 = vrot.lane.b32.xlu0 %v445, 64
      %v456 = vpop.permute.xlu0 %455
      %457 = vrot.lane.b32.xlu0 %v450, 64
      %v458 = vpop.permute.xlu0 %457
      %v461 = vsub.f32 %v435, %v456
      %v462 = vsub.f32 %v440, %v458
      %v463 = vadd.f32 %v435, %v456
      %v464 = vadd.f32 %v440, %v458
      %v465 = vld [vmem:[%s4] sm:$0xff]
      %v466 = vld [vmem:[%s4 + $0x8] sm:$0xff]
      %v467 = vsel %vm355, %v461, %v463
      %v468 = vsel %vm355, %v462, %v464
      %v469 = vmul.f32 %v465, %v467
      %v470 = vmul.f32 %v466, %v468
      %471 = vst [vmem:[%s224] sm:$0xff] %v469
      %472 = vst [vmem:[%s224 + $0x8] sm:$0xff] %v470
      %p473 = scmp.lt.s32.totalorder %s16, 1
      %s474 = scalar_select %p473, %s16, 1
      %s475 = smul.addr %s474, 2
      %s476 = smul.addr %s475, 8
      %s477 = scalar_lea.vmem %s5, %s476
      // Predicated region
      $region41: #{encode_forward.1} parent=39 // pred_check
        %p478 = pneg %p144
      $region42: #{encode_forward.1} parent=39 // pred_check_branch
        %480 = sbr.rel (%p478) target = $region44
      $region43: #{encode_forward.1} parent=39 // pred_region
        _
      $region44: #{encode_forward.1} parent=39 // pred_fallthru
        _
    $region40: #{encode_forward.1} parent=5 // pred_fallthru
      _
    %p481 = scmp.le.s32.totalorder 2, %s11
    // Predicated region
    $region45: #{encode_forward.1} parent=5 // pred_check
      %p482 = pneg %p481
    $region46: #{encode_forward.1} parent=5 // pred_check_branch
      %484 = sbr.rel (%p482) target = $region48
    $region47: #{encode_forward.1} parent=5 // pred_region
      %s485 = ssub.s32 %s11, 2
      // Predicated region
      $region49: #{encode_forward.1} parent=47 // pred_check
        %p486 = pneg %p150
      $region50: #{encode_forward.1} parent=47 // pred_check_branch
        %488 = sbr.rel (%p486) target = $region52
      $region51: #{encode_forward.1} parent=47 // pred_region
        %p489 = scmp.lt.s32.totalorder %s17, 1
        %s490 = scalar_select %p489, %s17, 1
        %s491 = smul.addr %s490, 2
        %s492 = smul.addr %s491, 8
        %s493 = scalar_lea.vmem %s5, %s492
      $region52: #{encode_forward.1} parent=47 // pred_fallthru
        _
    $region48: #{encode_forward.1} parent=5 // pred_fallthru
      _
  $region6: #{encode_forward.1} parent=0 // loop_footer
    %s15 = sadd.s32 1, %s11
  $region7: #{encode_forward.1} parent=0 // loop_footer_branch
    %10 = sbr.rel target = $region3
  $region8: #{encode_forward.1} parent=0 // loop_exit
    _

</llo_original>
